<compile_context>
chip_gen: v7x
topology: tpu7x:2x2x1
jax: 0.10.0
libtpu: 0.0.40
codegen_flags: <defaults>
</compile_context>

<pallas_src>
import functools

import numpy as np
import jax
import jax.numpy as jnp
from jax.experimental import pallas as pl
from jax.experimental.pallas import tpu as pltpu


# ---------------------------------------------------------------------------
# Pallas kernel: lane-dense fused GEMM
#   out^T = act( (W @ patches^T) * scale + shift ),  accumulation in f32.
# W block (Cp, K) and scale/shift (Cp, 1) are VMEM-resident; patches stream
# over M tiles.  No K grid axis (full-K block).
# ---------------------------------------------------------------------------
def _matmul_bn_act_kernel(w_ref, x_ref, scale_ref, shift_ref, o_ref, *, relu):
    acc = jnp.dot(w_ref[...], x_ref[...], preferred_element_type=jnp.float32)
    y = acc * scale_ref[...] + shift_ref[...]
    if relu:
        y = jnp.maximum(y, 0.0)
    o_ref[...] = y


def _round_up(x, m):
    return (x + m - 1) // m * m


# budget (bytes) for the double-buffered bf16 patch block (K, TM)
_A_BLOCK_BUDGET = 20 * 1024 * 1024


def fused_matmul_T(w2d, aT, scale, shift, relu):
    """w2d: (Cout, K) f32, aT: (K, M) bf16, scale/shift: (Cout,) f32.
    Returns act((w2d @ aT) * scale + shift) as (Cout, M) f32."""
    Cout, K = w2d.shape
    _, M = aT.shape

    Cp = _round_up(Cout, 8)                    # sublane pad only (lane-dense out)
    TM = min(_round_up(M, 128), 512)
    while TM > 128 and 2 * K * TM * 2 > _A_BLOCK_BUDGET:
        TM //= 2
    Mp = _round_up(M, TM)

    if Mp != M:
        aT = jnp.pad(aT, ((0, 0), (0, Mp - M)))
    if Cp != Cout:
        w2d = jnp.pad(w2d, ((0, Cp - Cout), (0, 0)))
        scale = jnp.pad(scale, (0, Cp - Cout))
        shift = jnp.pad(shift, (0, Cp - Cout))

    out = pl.pallas_call(
        functools.partial(_matmul_bn_act_kernel, relu=relu),
        out_shape=jax.ShapeDtypeStruct((Cp, Mp), jnp.float32),
        grid=(Mp // TM,),
        in_specs=[
            pl.BlockSpec((Cp, K), lambda i: (0, 0)),    # weights: VMEM-resident
            pl.BlockSpec((K, TM), lambda i: (0, i)),    # patches: streamed over M
            pl.BlockSpec((Cp, 1), lambda i: (0, 0)),    # folded BN scale
            pl.BlockSpec((Cp, 1), lambda i: (0, 0)),    # folded BN shift (+bias)
        ],
        out_specs=pl.BlockSpec((Cp, TM), lambda i: (0, i)),
        compiler_params=pltpu.CompilerParams(
            dimension_semantics=("parallel",),
            vmem_limit_bytes=64 * 1024 * 1024),
    )(w2d.astype(jnp.bfloat16), aT, scale.reshape(Cp, 1), shift.reshape(Cp, 1))
    return out[:Cout, :M]


# ---------------------------------------------------------------------------
# im2col (transposed layout) for 3-D conv — plain-JAX data rearrangement.
# Produces (C*k^3, Do*Ho*Wo) directly so no extra transpose of a big array.
# ---------------------------------------------------------------------------
def _im2col_3d_T(x, k, stride, pad):
    """x: (C, D, H, W) -> (C*k^3, Do*Ho*Wo), plus output spatial dims."""
    C, D, H, W = x.shape
    xp = jnp.pad(x, ((0, 0), (pad, pad), (pad, pad), (pad, pad)))
    Do = (D + 2 * pad - k) // stride + 1
    Ho = (H + 2 * pad - k) // stride + 1
    Wo = (W + 2 * pad - k) // stride + 1

    a = jnp.stack([xp[:, o:o + (Do - 1) * stride + 1:stride, :, :]
                   for o in range(k)], axis=1)               # (C, kd, Do, Hp, Wp)
    b = jnp.stack([a[:, :, :, o:o + (Ho - 1) * stride + 1:stride, :]
                   for o in range(k)], axis=2)               # (C, kd, kh, Do, Ho, Wp)
    c = jnp.stack([b[:, :, :, :, :, o:o + (Wo - 1) * stride + 1:stride]
                   for o in range(k)], axis=3)               # (C, kd, kh, kw, Do, Ho, Wo)
    return c.reshape(C * k * k * k, Do * Ho * Wo), (Do, Ho, Wo)


def conv3d_fused(x, w, scale, shift, *, stride, pad, relu):
    """x: (N, Cin, D, H, W), w: (Cout, Cin, k, k, k) -> (N, Cout, Do, Ho, Wo)."""
    N = x.shape[0]
    Cout, Cin, k = w.shape[0], w.shape[1], w.shape[2]
    xb = x.astype(jnp.bfloat16)                     # halve im2col HBM traffic
    cols, dims = [], None
    for n in range(N):
        aT, dims = _im2col_3d_T(xb[n], k, stride, pad)
        cols.append(aT)
    A_T = cols[0] if N == 1 else jnp.concatenate(cols, axis=1)   # (K, N*Do*Ho*Wo)
    out = fused_matmul_T(w.reshape(Cout, Cin * k ** 3), A_T, scale, shift, relu)
    Do, Ho, Wo = dims
    return out.reshape(Cout, N, Do, Ho, Wo).transpose(1, 0, 2, 3, 4)


def _dilate3d(x, stride):
    if stride == 1:
        return x
    N, C, D, H, W = x.shape
    out = jnp.zeros((N, C, (D - 1) * stride + 1,
                     (H - 1) * stride + 1, (W - 1) * stride + 1), x.dtype)
    return out.at[:, :, ::stride, ::stride, ::stride].set(x)


def conv_transpose3d_fused(x, w_eq, scale, shift, *, stride, pad):
    """ConvTranspose3d as: dilate input by stride, pad (k-1-pad), stride-1 conv.
    w_eq is the equivalent forward-conv weight (Cout, Cin, k, k, k) — for the
    spatially symmetric, identically-tiled bilinear filters used here it equals
    the PyTorch transposed weight (no flip / channel swap needed)."""
    k = w_eq.shape[2]
    xd = _dilate3d(x, stride)
    return conv3d_fused(xd, w_eq, scale, shift, stride=1, pad=k - 1 - pad, relu=True)


# ---------------------------------------------------------------------------
# Pallas kernel: Softmax2d over the depth axis + soft-argmax reduction.
# Block: (1, D, H*W); softmax over D, weighted sum with linspace(0,1,D).
# ---------------------------------------------------------------------------
def _soft_argmax_kernel(x_ref, o_ref):
    x = x_ref[0]                                   # (D, HW)
    D = x.shape[0]
    m = jnp.max(x, axis=0, keepdims=True)
    e = jnp.exp(x - m)
    s = jnp.sum(e, axis=0, keepdims=True)
    w = jax.lax.broadcasted_iota(jnp.float32, (D, 1), 0) / float(max(D - 1, 1))
    num = jnp.sum(w * e, axis=0, keepdims=True)
    o_ref[0] = num / s


def soft_argmax_call(denoise):
    """denoise: (N, D, H, W) -> (N, 1, H, W)."""
    N, D, H, W = denoise.shape
    x = denoise.reshape(N, D, H * W)
    out = pl.pallas_call(
        _soft_argmax_kernel,
        out_shape=jax.ShapeDtypeStruct((N, 1, H * W), jnp.float32),
        grid=(N,),
        in_specs=[pl.BlockSpec((1, D, H * W), lambda n: (n, 0, 0))],
        out_specs=pl.BlockSpec((1, 1, H * W), lambda n: (n, 0, 0)),
        compiler_params=pltpu.CompilerParams(dimension_semantics=("parallel",)),
    )(x)
    return out.reshape(N, 1, H, W)


# ---------------------------------------------------------------------------
# Parameters (deterministic, in-script).
# ---------------------------------------------------------------------------
def _upsample_filter_3d(size):
    factor = (size + 1) // 2
    center = factor - 1.0 if size % 2 == 1 else factor - 0.5
    og = np.ogrid[:size, :size, :size]
    f = ((1 - abs(og[0] - center) / factor)
         * (1 - abs(og[1] - center) / factor)
         * (1 - abs(og[2] - center) / factor))
    return jnp.asarray(f, jnp.float32)


def _conv_layer_params(key, cin, cout, k, bn=True, bilinear=False):
    eps = 1e-5
    if bilinear:
        f = _upsample_filter_3d(k)
        w = jnp.tile(f[None, None], (cout, cin, 1, 1, 1))
        b = jnp.zeros((cout,), jnp.float32)
    else:
        kw_, kb_ = jax.random.split(key)
        std = 1.0 / np.sqrt(cin * k ** 3)
        w = jax.random.normal(kw_, (cout, cin, k, k, k), jnp.float32) * std
        b = jax.random.uniform(kb_, (cout,), jnp.float32, minval=-std, maxval=std)
    if bn:
        gamma = jnp.ones((cout,), jnp.float32)
        beta = jnp.zeros((cout,), jnp.float32)
        run_mean = jnp.zeros((cout,), jnp.float32)
        run_var = jnp.ones((cout,), jnp.float32)
        scale = gamma / jnp.sqrt(run_var + eps)
        shift = beta + (b - run_mean) * scale
    else:
        scale = jnp.ones((cout,), jnp.float32)
        shift = b
    return (w, scale, shift)


def build_params(key):
    keys = iter(jax.random.split(key, 32))
    p = {}
    p['ds1'] = _conv_layer_params(next(keys), 1, 1, 7, bilinear=True)
    p['ds2'] = _conv_layer_params(next(keys), 1, 1, 5, bilinear=True)
    p['ds3'] = _conv_layer_params(next(keys), 1, 1, 3, bilinear=True)
    p['up1'] = _conv_layer_params(next(keys), 36, 36, 6, bilinear=True)
    p['up2'] = _conv_layer_params(next(keys), 28, 28, 6, bilinear=True)
    p['up3'] = _conv_layer_params(next(keys), 16, 16, 6, bilinear=True)
    p['conv0'] = [_conv_layer_params(next(keys), 1, 4, 9),
                  _conv_layer_params(next(keys), 4, 4, 9),
                  _conv_layer_params(next(keys), 4, 4, 9)]
    p['conv1'] = [_conv_layer_params(next(keys), 1, 8, 7),
                  _conv_layer_params(next(keys), 8, 8, 7),
                  _conv_layer_params(next(keys), 8, 8, 7)]
    p['conv2'] = [_conv_layer_params(next(keys), 1, 12, 5),
                  _conv_layer_params(next(keys), 12, 12, 5),
                  _conv_layer_params(next(keys), 12, 12, 5)]
    p['conv3'] = [_conv_layer_params(next(keys), 1, 16, 3),
                  _conv_layer_params(next(keys), 16, 16, 3),
                  _conv_layer_params(next(keys), 16, 16, 3)]
    p['refine'] = [_conv_layer_params(next(keys), 40, 16, 7),
                   _conv_layer_params(next(keys), 16, 16, 7),
                   _conv_layer_params(next(keys), 16, 16, 7)]
    p['regress'] = [_conv_layer_params(next(keys), 16, 1, 7, bn=False)]
    return p


# ---------------------------------------------------------------------------
# Forward pass (mirrors DenoiseModel.forward).
# ---------------------------------------------------------------------------
def _seq3(x, layers, pad):
    for (w, scale, shift) in layers:
        x = conv3d_fused(x, w, scale, shift, stride=1, pad=pad, relu=True)
    return x


def denoise_forward(spad, p):
    """spad: (N, 1, D, H, W) -> (denoise_out (N, D, H, W), soft_argmax (N, 1, H, W))."""
    ds1 = conv3d_fused(spad, *p['ds1'], stride=2, pad=3, relu=True)
    ds2 = conv3d_fused(ds1, *p['ds2'], stride=2, pad=2, relu=True)
    ds3 = conv3d_fused(ds2, *p['ds3'], stride=2, pad=1, relu=True)

    conv0 = _seq3(spad, p['conv0'], pad=4)
    conv1 = _seq3(ds1, p['conv1'], pad=3)
    conv2 = _seq3(ds2, p['conv2'], pad=2)
    conv3 = _seq3(ds3, p['conv3'], pad=1)

    up3 = conv_transpose3d_fused(conv3, *p['up3'], stride=2, pad=2)
    up2 = conv_transpose3d_fused(jnp.concatenate([conv2, up3], axis=1),
                                 *p['up2'], stride=2, pad=2)
    up1 = conv_transpose3d_fused(jnp.concatenate([conv1, up2], axis=1),
                                 *p['up1'], stride=2, pad=2)
    up0 = jnp.concatenate([conv0, up1], axis=1)

    refine = _seq3(up0, p['refine'], pad=3)
    regress = conv3d_fused(refine, *p['regress'][0], stride=1, pad=3, relu=False)

    denoise_out = regress[:, 0]                    # squeeze channel dim -> (N, D, H, W)
    soft_argmax = soft_argmax_call(denoise_out)    # Softmax2d over D + weighted sum
    return denoise_out, soft_argmax


# ---------------------------------------------------------------------------
# Main
# ---------------------------------------------------------------------------
if __name__ == "__main__":
    # --- tiny sanity check of the im2col + lane-dense Pallas GEMM conv path ---
    kx1, kw1, kb1 = jax.random.split(jax.random.PRNGKey(1), 3)
    xt = jax.random.normal(kx1, (1, 2, 6, 6, 6), jnp.float32)
    wt = jax.random.normal(kw1, (5, 2, 3, 3, 3), jnp.float32) * 0.2
    bt = jax.random.normal(kb1, (5,), jnp.float32) * 0.1
    ones5 = jnp.ones((5,), jnp.float32)
    for stride in (1, 2):
        got = conv3d_fused(xt, wt, ones5, bt, stride=stride, pad=1, relu=False)
        ref = jax.lax.conv_general_dilated(
            xt, wt, window_strides=(stride,) * 3, padding=[(1, 1)] * 3,
            dimension_numbers=('NCDHW', 'OIDHW', 'NCDHW')) + bt.reshape(1, -1, 1, 1, 1)
        err = float(np.max(np.abs(np.asarray(got) - np.asarray(ref))))
        denom = float(np.max(np.abs(np.asarray(ref)))) + 1e-6
        assert err / denom < 3e-2, f"conv3d check failed (stride={stride}): {err / denom}"

    # --- full model (small shapes: batch=2, 1 channel, 8^3 volume) ------------
    key = jax.random.PRNGKey(0)
    k_params, k_input = jax.random.split(key)
    params = build_params(k_params)

    N, D, H, W = 2, 8, 8, 8
    spad = jax.random.uniform(k_input, (N, 1, D, H, W), jnp.float32)

    fwd = jax.jit(denoise_forward)
    denoise_out, soft_argmax = fwd(spad, params)
    jax.block_until_ready((denoise_out, soft_argmax))

    assert denoise_out.shape == (N, D, H, W)
    assert soft_argmax.shape == (N, 1, H, W)
    assert np.all(np.isfinite(np.asarray(denoise_out)))
    assert np.all(np.isfinite(np.asarray(soft_argmax)))
    # soft-argmax of a softmax with linspace(0,1) weights lies in [0, 1]
    assert float(np.min(np.asarray(soft_argmax))) >= -1e-5
    assert float(np.max(np.asarray(soft_argmax))) <= 1.0 + 1e-5

    print("KERNEL_OK")
</pallas_src>

<mosaic_0001>
module attributes {stable_mosaic.version = 11 : i64} {
  func.func @_matmul_bn_act_kernel(%arg0: i32, %arg1: memref<8x54xbf16, #tpu.memory_space<vmem>>, %arg2: memref<54x256xbf16, #tpu.memory_space<vmem>>, %arg3: memref<8x1xf32, #tpu.memory_space<vmem>>, %arg4: memref<8x1xf32, #tpu.memory_space<vmem>>, %arg5: memref<8x256xf32, #tpu.memory_space<vmem>>) attributes {dimension_semantics = [#tpu.dimension_semantics<parallel>], iteration_bounds = array<i64: 1>, scalar_prefetch = 0 : i64, scratch_operands = 0 : i64, tpu.core_type = #tpu.core_type<tc>, window_params = [{pipeline_mode = #tpu.pipeline_mode<synchronous>, transform_indices = @transform_0, window_bounds = array<i64: 8, 54>}, {transform_indices = @transform_1, window_bounds = array<i64: 54, 256>}, {pipeline_mode = #tpu.pipeline_mode<synchronous>, transform_indices = @transform_2, window_bounds = array<i64: 8, 1>}, {pipeline_mode = #tpu.pipeline_mode<synchronous>, transform_indices = @transform_3, window_bounds = array<i64: 8, 1>}, {transform_indices = @transform_4, window_bounds = array<i64: 8, 256>}]} {
    %c0 = arith.constant 0 : index
    %c0_0 = arith.constant 0 : index
    %0 = vector.load %arg1[%c0, %c0_0] : memref<8x54xbf16, #tpu.memory_space<vmem>>, vector<8x54xbf16>
    %c0_1 = arith.constant 0 : index
    %c0_2 = arith.constant 0 : index
    %1 = vector.load %arg2[%c0_1, %c0_2] : memref<54x256xbf16, #tpu.memory_space<vmem>>, vector<54x256xbf16>
    %cst = arith.constant dense<0.000000e+00> : vector<8x256xf32>
    %2 = tpu.matmul %0, %1, %cst {dimension_numbers = #tpu.dot_dimension_numbers<[1], [0], [0], [1], [0, 0, 1, 1], [], []>} : vector<8x54xbf16>, vector<54x256xbf16>, vector<8x256xf32> -> vector<8x256xf32>
    %c0_3 = arith.constant 0 : index
    %c0_4 = arith.constant 0 : index
    %3 = vector.load %arg3[%c0_3, %c0_4] : memref<8x1xf32, #tpu.memory_space<vmem>>, vector<8x1xf32>
    %4 = vector.broadcast %3 : vector<8x1xf32> to vector<8x256xf32>
    %5 = arith.mulf %2, %4 : vector<8x256xf32>
    %c0_5 = arith.constant 0 : index
    %c0_6 = arith.constant 0 : index
    %6 = vector.load %arg4[%c0_5, %c0_6] : memref<8x1xf32, #tpu.memory_space<vmem>>, vector<8x1xf32>
    %7 = vector.broadcast %6 : vector<8x1xf32> to vector<8x256xf32>
    %8 = arith.addf %5, %7 : vector<8x256xf32>
    %c0_7 = arith.constant 0 : index
    %c0_8 = arith.constant 0 : index
    %9 = vector.load %arg5[%c0_7, %c0_8] : memref<8x256xf32, #tpu.memory_space<vmem>>, vector<8x256xf32>
    tpu.vector_store %arg5[%c0_7, %c0_8], %8 {strides = array<i32>} : memref<8x256xf32, #tpu.memory_space<vmem>>, vector<8x256xf32>,
    return
  }
  func.func @transform_0(%arg0: i32) -> (i32, i32) {
    %c0_i32 = arith.constant 0 : i32
    %c0_i32_0 = arith.constant 0 : i32
    %c0_i32_1 = arith.constant 0 : i32
    return %c0_i32, %c0_i32_0 : i32, i32
  }
  func.func @transform_1(%arg0: i32) -> (i32, i32) {
    %c0_i32 = arith.constant 0 : i32
    %c0_i32_0 = arith.constant 0 : i32
    return %c0_i32, %arg0 : i32, i32
  }
  func.func @transform_2(%arg0: i32) -> (i32, i32) {
    %c0_i32 = arith.constant 0 : i32
    %c0_i32_0 = arith.constant 0 : i32
    %c0_i32_1 = arith.constant 0 : i32
    return %c0_i32, %c0_i32_0 : i32, i32
  }
  func.func @transform_3(%arg0: i32) -> (i32, i32) {
    %c0_i32 = arith.constant 0 : i32
    %c0_i32_0 = arith.constant 0 : i32
    %c0_i32_1 = arith.constant 0 : i32
    return %c0_i32, %c0_i32_0 : i32, i32
  }
  func.func @transform_4(%arg0: i32) -> (i32, i32) {
    %c0_i32 = arith.constant 0 : i32
    %c0_i32_0 = arith.constant 0 : i32
    return %c0_i32, %arg0 : i32, i32
  }
}

</mosaic_0001>

<llo_original>
// kernel: tpu_custom_call.1
$region0: #{tpu_custom_call.1}
  #allocation0 [shape = 'u32[]', space=smem, size = 0x4, offset = 0x4, fixed_abs, tag = 'smem constant byte address 0x4 - core index']
  #allocation1 [shape = 'u32[144,128]{1,0:T(1,128)}', space=vmem, size = 0x12000, scoped, tag = 'internal scratch']
  %s0 = inlined_call_operand.hbm [shape: bf16[8,54], index: 0, kind: input, shape index: {}]
  %s1 = inlined_call_operand.hbm [shape: bf16[54,256], index: 1, kind: input, shape index: {}]
  %s2 = inlined_call_operand.hbm [shape: f32[8,1], index: 2, kind: input, shape index: {}]
  %s3 = inlined_call_operand.hbm [shape: f32[8,1], index: 3, kind: input, shape index: {}]
  %s4 = inlined_call_operand.hbm [shape: f32[8,256], index: 4, kind: output, shape index: {}]
  %s5 = sld [smem:[#allocation0]]
  $region42: #{tpu_custom_call.1} parent=0
    _
  %s7 = ssub.s32 1, %s5
  %s8 = scalar_select 0, %s7, %s5
  $region1: #{tpu_custom_call.1} parent=0
    #allocation2 [shape = 'u8[2048]{0}', space=vmem, size = 0x800, scoped, tag = 'input window, operand 0, single buffered']
    #allocation3 [shape = 's32[1]{0}', space=sflag, size = 0x4, scoped, tag = 'scoped memory for tpu_custom_call.1']
    #allocation4 [shape = 's32[1]{0}', space=sflag, size = 0x4, scoped, tag = 'scoped memory for tpu_custom_call.1']
    #allocation5 [shape = 'u8[28672]{0}', space=vmem, size = 0x7000, scoped, tag = 'input window, operand 1, single buffered']
    #allocation6 [shape = 's32[1]{0}', space=sflag, size = 0x4, scoped, tag = 'scoped memory for tpu_custom_call.1']
    #allocation7 [shape = 'u8[4096]{0}', space=vmem, size = 0x1000, scoped, tag = 'input window, operand 2, single buffered']
    #allocation8 [shape = 'u8[4096]{0}', space=vmem, size = 0x1000, scoped, tag = 'input window, operand 3, single buffered']
    #allocation9 [shape = 's32[1]{0}', space=sflag, size = 0x4, scoped, tag = 'scoped memory for tpu_custom_call.1']
    #allocation10 [shape = 'u8[8192]{0}', space=vmem, size = 0x2000, scoped, tag = 'output window, operand 0, single buffered']
    %9 = vsyncpa [#allocation3], 0
    %10 = vsyncpa [#allocation6], 0
    %11 = vsyncpa [#allocation9], 0
    %12 = vsyncpa [#allocation4], 0
    // Predicated region
    $region2: #{tpu_custom_call.1} parent=1 // pred_check
      _
    $region3: #{tpu_custom_call.1} parent=1 // pred_check_branch
      %14 = sbr.rel (0) target = $region5
    $region4: #{tpu_custom_call.1} parent=1 // pred_region
      %s16 = ssub.s32 64, 64
      %17 = vsyncadd [#allocation3], %s16
      %s19 = sshll.u32 [#allocation2], 4
      %s20 = int_to_ptr.vmem [resolvable:$true] %s19
      %22 = dma.hbm_to_vmem [thread:$0]  %s0, 64, %s20, [#allocation3]
    $region5: #{tpu_custom_call.1} parent=1 // pred_fallthru
      _
    // Predicated region
    $region6: #{tpu_custom_call.1} parent=1 // pred_check
      _
    $region7: #{tpu_custom_call.1} parent=1 // pred_check_branch
      %24 = sbr.rel (0) target = $region9
    $region8: #{tpu_custom_call.1} parent=1 // pred_region
      %s26 = ssub.s32 896, 896
      %27 = vsyncadd [#allocation6], %s26
      %s28 = sshll.u32 [#allocation5], 4
      %s29 = int_to_ptr.vmem [resolvable:$true] %s28
      %34 = dma.hbm_to_vmem [thread:$0]  %s1, 896, %s29, [#allocation6], 128, 128, 8
    $region9: #{tpu_custom_call.1} parent=1 // pred_fallthru
      _
    // Predicated region
    $region10: #{tpu_custom_call.1} parent=1 // pred_check
      _
    $region11: #{tpu_custom_call.1} parent=1 // pred_check_branch
      %36 = sbr.rel (0) target = $region13
    $region12: #{tpu_custom_call.1} parent=1 // pred_region
      %s38 = ssub.s32 128, 128
      %39 = vsyncadd [#allocation6], %s38
      %s41 = sshll.u32 [#allocation7], 4
      %s42 = int_to_ptr.vmem [resolvable:$true] %s41
      %44 = dma.hbm_to_vmem [thread:$0]  %s2, 128, %s42, [#allocation6]
    $region13: #{tpu_custom_call.1} parent=1 // pred_fallthru
      _
    // Predicated region
    $region14: #{tpu_custom_call.1} parent=1 // pred_check
      _
    $region15: #{tpu_custom_call.1} parent=1 // pred_check_branch
      %46 = sbr.rel (0) target = $region17
    $region16: #{tpu_custom_call.1} parent=1 // pred_region
      %s48 = ssub.s32 128, 128
      %49 = vsyncadd [#allocation9], %s48
      %s51 = sshll.u32 [#allocation8], 4
      %s52 = int_to_ptr.vmem [resolvable:$true] %s51
      %54 = dma.hbm_to_vmem [thread:$0]  %s3, 128, %s52, [#allocation9]
    $region17: #{tpu_custom_call.1} parent=1 // pred_fallthru
      _
    // Predicated region
    $region18: #{tpu_custom_call.1} parent=1 // pred_check
      _
    $region19: #{tpu_custom_call.1} parent=1 // pred_check_branch
      %56 = sbr.rel (0) target = $region21
    $region20: #{tpu_custom_call.1} parent=1 // pred_region
      %57 = dma.done [#allocation3], 64
    $region21: #{tpu_custom_call.1} parent=1 // pred_fallthru
      _
    // Predicated region
    $region22: #{tpu_custom_call.1} parent=1 // pred_check
      _
    $region23: #{tpu_custom_call.1} parent=1 // pred_check_branch
      %59 = sbr.rel (0) target = $region25
    $region24: #{tpu_custom_call.1} parent=1 // pred_region
      %60 = dma.done [#allocation6], 896
    $region25: #{tpu_custom_call.1} parent=1 // pred_fallthru
      _
    // Predicated region
    $region26: #{tpu_custom_call.1} parent=1 // pred_check
      _
    $region27: #{tpu_custom_call.1} parent=1 // pred_check_branch
      %62 = sbr.rel (0) target = $region29
    $region28: #{tpu_custom_call.1} parent=1 // pred_region
      %63 = dma.done [#allocation6], 128
    $region29: #{tpu_custom_call.1} parent=1 // pred_fallthru
      _
    // Predicated region
    $region30: #{tpu_custom_call.1} parent=1 // pred_check
      _
    $region31: #{tpu_custom_call.1} parent=1 // pred_check_branch
      %65 = sbr.rel (0) target = $region33
    $region32: #{tpu_custom_call.1} parent=1 // pred_region
      %66 = dma.done [#allocation9], 128
    $region33: #{tpu_custom_call.1} parent=1 // pred_fallthru
      _
    %v68 = vld [vmem:[#allocation2] sm:$0xf]
    %v69 = vld [vmem:[#allocation5] sm:$0xff]
    %v70 = vld [vmem:[#allocation5 + $0x8] sm:$0xff]
    %v71 = vld [vmem:[#allocation5 + $0x10] sm:$0xff]
    %v72 = vld [vmem:[#allocation5 + $0x18] sm:$0xff]
    %v73 = vld [vmem:[#allocation5 + $0x20] sm:$0xff]
    %v74 = vld [vmem:[#allocation5 + $0x28] sm:$0xff]
    %v75 = vld [vmem:[#allocation5 + $0x30] sm:$0x77]
    %v83 = vunpack.c.l.b16 %v69
    %v84 = vunpack.c.h.b16 %v69
    %v85 = vunpack.c.l.b16 %v70
    %v86 = vunpack.c.h.b16 %v70
    %v87 = vunpack.c.l.b16 %v71
    %v88 = vunpack.c.h.b16 %v71
    %v89 = vunpack.c.l.b16 %v72
    %v90 = vunpack.c.h.b16 %v72
    %v91 = vunpack.c.l.b16 %v73
    %v92 = vunpack.c.h.b16 %v73
    %v93 = vunpack.c.l.b16 %v74
    %v94 = vunpack.c.h.b16 %v74
    %v95 = vunpack.c.l.b16 %v75
    %v96 = vunpack.c.h.b16 %v75
    %v97 = vpack.c.b16 %v85, %v83
    %v98 = vpack.c.b16 %v86, %v84
    %v99 = vpack.c.b16 %v89, %v87
    %v100 = vpack.c.b16 %v90, %v88
    %v101 = vpack.c.b16 %v93, %v91
    %v102 = vpack.c.b16 %v94, %v92
    %v103 = vpack.c.b16 %v95, %v95
    %v104 = vpack.c.b16 %v96, %v96
    %vm111 = vcmask 441344
    %v113 = vsel %vm111, %v68, 0
    %vm115 = vcmask 1042432
    %v117 = vsel %vm115, %v103, 0
    %v120 = vsel %vm115, %v104, 0
    %122 = vmatprep.subr.bf16.mxu0 %v98
    %123 = vmatpush1.bf16.msra.mxu0 %v97
    %124 = vmatprep.subr.bf16.mxu0 %v100
    %125 = vmatpush1.bf16.msra.mxu0 %v99
    %126 = vmatprep.subr.bf16.mxu0 %v102
    %127 = vmatpush1.bf16.msra.mxu0 %v101
    %128 = vmatprep.subr.bf16.mxu0 %v120
    %129 = vmatpush1.bf16.msra.mxu0 %v117
    %130 = vmatprep.subr.bf16.mxu0 0
    %131 = vmatpush1.bf16.msra.mxu0 0
    %132 = vmatprep.subr.bf16.mxu0 0
    %133 = vmatpush1.bf16.msra.mxu0 0
    %134 = vmatprep.subr.bf16.mxu0 0
    %135 = vmatpush1.bf16.msra.mxu0 0
    %136 = vmatprep.subr.bf16.mxu0 0
    %137 = vmatpush1.bf16.msra.mxu0 0
    %138 = vmatprep.subr.bf16.mxu0 0
    %139 = vmatpush1.bf16.msra.mxu0 0
    %140 = vmatprep.subr.bf16.mxu0 0
    %141 = vmatpush1.bf16.msra.mxu0 0
    %142 = vmatprep.subr.bf16.mxu0 0
    %143 = vmatpush1.bf16.msra.mxu0 0
    %144 = vmatprep.subr.bf16.mxu0 0
    %145 = vmatpush1.bf16.msra.mxu0 0
    %146 = vmatprep.subr.bf16.mxu0 0
    %147 = vmatpush1.bf16.msra.mxu0 0
    %148 = vmatprep.subr.bf16.mxu0 0
    %149 = vmatpush1.bf16.msra.mxu0 0
    %150 = vmatprep.subr.bf16.mxu0 0
    %151 = vmatpush1.bf16.msra.mxu0 0
    %152 = vmatprep.subr.bf16.mxu0 0
    %153 = vmatpush1.bf16.msra.mxu0 0
    %154 = vmatprep.mubr.bf16.mxu0 0
    %155 = vmatmul.mubr.bf16.gmra.mrb[0].mxu0 %v113
    %v156 = vpop.f32.mrb[0].mxu0
    %v157 = vadd.f32 0.0, %v156
    %v158 = vpop.f32.mrb[0].mxu0
    %v159 = vadd.f32 0.0, %v158
    %v160 = vpop.f32.mrb[0].mxu0
    %v161 = vpop.f32.mrb[0].mxu0
    %162 = vdwg.mxu0
    %v163 = vld [vmem:[#allocation7] sm:$0xff]
    %165 = vset.pattern.permute.xlu0 0
    %166 = vperm.xlu0 %165, %v163
    %v167 = vpop.permute.xlu0 %166
    %v169 = vmul.f32 %v157, %v167
    %v170 = vmul.f32 %v159, %v167
    %v171 = vld [vmem:[#allocation8] sm:$0xff]
    %173 = vset.pattern.permute.xlu0 0
    %174 = vperm.xlu0 %173, %v171
    %v175 = vpop.permute.xlu0 %174
    %v177 = vadd.f32 %v169, %v175
    %v178 = vadd.f32 %v170, %v175
    %179 = vst [vmem:[#allocation10] sm:$0xff] %v177
    %180 = vst [vmem:[#allocation10 + $0x8] sm:$0xff] %v178
    // Predicated region
    $region34: #{tpu_custom_call.1} parent=1 // pred_check
      _
    $region35: #{tpu_custom_call.1} parent=1 // pred_check_branch
      %182 = sbr.rel (0) target = $region37
    $region36: #{tpu_custom_call.1} parent=1 // pred_region
      %s184 = ssub.s32 256, 256
      %185 = vsyncadd [#allocation4], %s184
      %s187 = sshll.u32 [#allocation10], 4
      %s188 = int_to_ptr.vmem [resolvable:$true] %s187
      %190 = dma.vmem_to_hbm [thread:$0]  %s188, 256, %s4, [#allocation4]
    $region37: #{tpu_custom_call.1} parent=1 // pred_fallthru
      _
    // Predicated region
    $region38: #{tpu_custom_call.1} parent=1 // pred_check
      _
    $region39: #{tpu_custom_call.1} parent=1 // pred_check_branch
      %192 = sbr.rel (0) target = $region41
    $region40: #{tpu_custom_call.1} parent=1 // pred_region
      %193 = dma.done [#allocation4], 256
    $region41: #{tpu_custom_call.1} parent=1 // pred_fallthru
      _
    %194 = vsyncpa [#allocation3], 1
    %195 = vsyncpa [#allocation6], 1
    %196 = vsyncpa [#allocation9], 1
    %197 = vsyncpa [#allocation4], 1

</llo_original>
